<compile_context>
chip_gen: v6e
topology: v6e:2x2x1
jax: 0.10.0
libtpu: 0.0.40
codegen_flags: <defaults>
</compile_context>

<pallas_src>
import math

import jax
import jax.numpy as jnp
from jax import lax
from jax.experimental import pallas as pl
from jax.experimental.pallas import tpu as pltpu

EPS = 1e-5  # torch.nn.LayerNorm default


# --------------------------------------------------------------------------- #
# Kernels
# --------------------------------------------------------------------------- #
def _make_rowwise_kernel(epilogue):
    """dim >= 128 (or non-divisor of 128): one LayerNorm row per tensor row."""

    def kernel(x_ref, g_ref, b_ref, o_ref):
        # x_ref: (tile_rows, dim); g_ref/b_ref: (1, dim) f32.
        x = x_ref[...].astype(jnp.float32)
        mean = jnp.mean(x, axis=-1, keepdims=True)
        c = x - mean
        var = jnp.mean(c * c, axis=-1, keepdims=True)  # biased variance (torch)
        y = c * lax.rsqrt(var + EPS) * g_ref[...] + b_ref[...]
        if epilogue is not None:
            y = epilogue(y)
        o_ref[...] = y.astype(o_ref.dtype)

    return kernel


def _make_packed_kernel(epilogue):
    """dim < 128 and 128 % dim == 0: k = 128//dim rows packed per lane-dense
    128-wide super-row.  Per-original-row mean/var are computed with a
    block-diagonal averaging matmul on the otherwise idle MXU (reduce +
    broadcast in one dot).  The matmul operands are split hi/lo into bf16 so
    only 2 plain bf16 MXU passes per statistic are needed while the result
    stays exact to ~1e-6 (1/dim is a power of two, hence bf16-exact)."""

    def seg_mean(v, avg):
        hi = v.astype(jnp.bfloat16)
        lo = (v - hi.astype(jnp.float32)).astype(jnp.bfloat16)
        return (jnp.dot(hi, avg, preferred_element_type=jnp.float32)
                + jnp.dot(lo, avg, preferred_element_type=jnp.float32))

    def kernel(x_ref, g_ref, b_ref, avg_ref, o_ref):
        # x_ref: (tile_rows, k*dim); g/b: (1, k*dim) f32; avg_ref: (k*dim, k*dim)
        # bf16 block-diagonal with 1/dim inside each dim-wide group.
        x = x_ref[...].astype(jnp.float32)
        avg = avg_ref[...]
        mean = seg_mean(x, avg)                 # per-row mean, lane-broadcast
        c = x - mean
        var = seg_mean(c * c, avg)              # per-row biased variance
        y = c * lax.rsqrt(var + EPS) * g_ref[...] + b_ref[...]
        if epilogue is not None:
            y = epilogue(y)
        o_ref[...] = y.astype(o_ref.dtype)

    return kernel


# --------------------------------------------------------------------------- #
# Sizing helpers
# --------------------------------------------------------------------------- #
def _tpu_env():
    """(vmem_capacity_bytes, num_tensorcores) with generation-aware fallbacks."""
    kind = ""
    try:
        kind = (getattr(jax.devices()[0], "device_kind", "") or "").lower()
    except Exception:
        pass
    is_v7 = ("v7" in kind) or ("7x" in kind)

    vmem = None
    try:
        info = pltpu.get_tpu_info()
        v = getattr(info, "vmem_capacity_bytes", None)
        if v:
            vmem = int(v)
    except Exception:
        pass
    if vmem is None:
        # v7x: 64 MiB per TensorCore; v5e/v6e: 128 MiB.
        vmem = (64 << 20) if is_v7 else (128 << 20)

    num_cores = 2 if is_v7 else 1
    return vmem, num_cores


def _pick_tile(srows, width, itemsize, vmem_cap, num_cores):
    """Row tile (in super-rows) and scoped-VMEM limit, sized from bytes."""
    # Sublane packing of the I/O dtype: 8 (f32), 16 (bf16), 32 (int8/fp8).
    packing = 8 * max(1, 4 // int(itemsize))
    small_vmem = vmem_cap <= (64 << 20)            # v7x per-TensorCore
    # Target input-tile bytes so per-step DMA time >> ~0.35us step overhead.
    target_bytes = (4 << 20) if small_vmem else (8 << 20)
    tile = max(target_bytes // (width * itemsize), packing)
    # VMEM footprint per row: double-buffered in + out tiles (native dtype)
    # plus ~6 live f32 working copies inside the body.
    bytes_per_row = width * (4 * itemsize + 6 * 4)
    budget = vmem_cap * 55 // 100
    tile = min(tile, max(budget // bytes_per_row, packing))
    tile = max((tile // packing) * packing, packing)
    # Keep >= 2 grid steps per TensorCore on the "parallel" axis (2 TCs on v7x)
    # so the megacore sharding stays load-balanced.
    min_steps = 2 * max(1, num_cores)
    if srows >= min_steps * packing:
        while tile > packing and pl.cdiv(srows, tile) < min_steps:
            tile = max(((tile // 2) // packing) * packing, packing)
    else:
        tile = min(tile, -(-srows // packing) * packing)
    tile = max(int(tile), packing)
    needed = tile * bytes_per_row + (16 << 20)
    vmem_limit = int(min(vmem_cap * 85 // 100, max(needed, 32 << 20)))
    return tile, vmem_limit


# --------------------------------------------------------------------------- #
# Wrapper
# --------------------------------------------------------------------------- #
def layernorm_pallas(x2d, gamma, beta, epilogue=None):
    """LayerNorm over the last axis of a (rows, dim) slab (+ optional fused
    elementwise epilogue applied in f32 before the store)."""
    rows, dim = x2d.shape
    if rows == 0:
        return x2d
    dtype = x2d.dtype
    itemsize = int(jnp.dtype(dtype).itemsize)
    vmem_cap, num_cores = _tpu_env()

    # Fold k rows into one lane-dense 128-wide super-row when possible.
    k = 128 // dim if (dim < 128 and 128 % dim == 0) else 1
    # TODO(synk): dims < 128 that don't divide 128 (e.g. 48, 96) still take the
    # masked-store row-wise path; lane-dense packing for those needs column
    # padding plus an output repack that costs an extra HBM pass.

    if k > 1:
        srows = -(-rows // k)
        if srows * k != rows:
            # Rare ragged case: pad so the (rows, dim) -> (srows, k*dim)
            # reshape stays a free view.  The grid itself is never padded.
            x2d = jnp.pad(x2d, ((0, srows * k - rows), (0, 0)))
        xs = x2d.reshape(srows, k * dim)
    else:
        srows = rows
        xs = x2d
    width = k * dim

    tile, vmem_limit = _pick_tile(srows, width, itemsize, vmem_cap, num_cores)
    # Edge block may run past srows: OOB reads are junk rows (row-independent),
    # OOB writes are dropped — no wrapper-side padding of the row axis.
    grid = pl.cdiv(srows, tile)

    g32 = gamma.astype(jnp.float32).reshape(1, dim)
    b32 = beta.astype(jnp.float32).reshape(1, dim)
    gamma_w = jnp.tile(g32, (1, k))
    beta_w = jnp.tile(b32, (1, k))

    row_spec = pl.BlockSpec((tile, width), lambda i: (i, 0))
    vec_spec = pl.BlockSpec((1, width), lambda i: (0, 0))
    cparams = pltpu.CompilerParams(
        dimension_semantics=("parallel",),
        vmem_limit_bytes=vmem_limit,
    )

    if k > 1:
        group = jnp.arange(width, dtype=jnp.int32) // dim
        avg = ((group[:, None] == group[None, :]).astype(jnp.float32)
               / float(dim)).astype(jnp.bfloat16)
        cost = pl.CostEstimate(
            # 4 bf16 matmul passes over (srows, width) x (width, width).
            flops=8 * srows * width * width + 10 * rows * dim,
            transcendentals=srows,
            bytes_accessed=2 * rows * dim * itemsize + width * width * 2
            + 2 * width * 4,
        )
        out = pl.pallas_call(
            _make_packed_kernel(epilogue),
            out_shape=jax.ShapeDtypeStruct((srows, width), dtype),
            grid_spec=pltpu.PrefetchScalarGridSpec(
                num_scalar_prefetch=0,
                grid=(grid,),
                in_specs=[row_spec, vec_spec, vec_spec,
                          pl.BlockSpec((width, width), lambda i: (0, 0))],
                out_specs=row_spec,
            ),
            compiler_params=cparams,
            cost_estimate=cost,
        )(xs, gamma_w, beta_w, avg)
        out = out.reshape(srows * k, dim)
        if srows * k != rows:
            out = out[:rows]
        return out

    cost = pl.CostEstimate(
        flops=10 * rows * dim,
        transcendentals=rows,
        bytes_accessed=2 * rows * dim * itemsize + 2 * dim * 4,
    )
    return pl.pallas_call(
        _make_rowwise_kernel(epilogue),
        out_shape=jax.ShapeDtypeStruct((rows, dim), dtype),
        grid_spec=pltpu.PrefetchScalarGridSpec(
            num_scalar_prefetch=0,
            grid=(grid,),
            in_specs=[row_spec, vec_spec, vec_spec],
            out_specs=row_spec,
        ),
        compiler_params=cparams,
        cost_estimate=cost,
    )(xs, gamma_w, beta_w)


def layer_normalize(x, gamma, beta, fn=None, fuse_fn=False, **kwargs):
    """Equivalent of LayerNormalize.forward: fn(LayerNorm(x), **kwargs).

    If `fuse_fn=True` and `fn` is elementwise, it is applied inside the kernel
    epilogue (before the store), saving one HBM read+write of the tensor."""
    dim = x.shape[-1]
    lead = x.shape[:-1]
    rows = math.prod(lead) if lead else 1
    epilogue = None
    if fn is not None and fuse_fn:
        epilogue = (lambda t: fn(t, **kwargs))
    y2d = layernorm_pallas(x.reshape(rows, dim), gamma, beta, epilogue=epilogue)
    y = y2d.reshape(*lead, dim)
    if fn is not None and not fuse_fn:
        y = fn(y, **kwargs)
    return y


def _reference(x, gamma, beta):
    x32 = x.astype(jnp.float32)
    mean = jnp.mean(x32, axis=-1, keepdims=True)
    var = jnp.mean((x32 - mean) ** 2, axis=-1, keepdims=True)
    return ((x32 - mean) / jnp.sqrt(var + EPS)) * gamma + beta


if __name__ == "__main__":
    key = jax.random.PRNGKey(0)
    k_x, k_g, k_b, k_x2 = jax.random.split(key, 4)

    # Shapes implied by the cross-transformer usage: (batch, seq, dim).
    batch, seq, dim = 2, 8, 32
    x = jax.random.normal(k_x, (batch, seq, dim), dtype=jnp.float32)
    gamma = 1.0 + 0.1 * jax.random.normal(k_g, (dim,), dtype=jnp.float32)
    beta = 0.1 * jax.random.normal(k_b, (dim,), dtype=jnp.float32)

    # 1) Packed lane-dense path (dim=32 -> 4 rows per 128-wide super-row), fn=id.
    out = jax.block_until_ready(layer_normalize(x, gamma, beta))
    ref = _reference(x, gamma, beta)
    assert out.shape == x.shape
    assert float(jnp.max(jnp.abs(out - ref))) < 1e-4, "packed path mismatch"

    # 2) Fused elementwise fn (GELU) inside the kernel epilogue.
    out_g = jax.block_until_ready(
        layer_normalize(x, gamma, beta, fn=jax.nn.gelu, fuse_fn=True))
    ref_g = jax.nn.gelu(ref)
    assert float(jnp.max(jnp.abs(out_g - ref_g))) < 1e-4, "fused-fn mismatch"

    # 3) Row-wise path (dim >= 128) with a ragged row count: no wrapper padding,
    #    the edge block runs partially out of bounds; multi-step parallel grid.
    d2 = 256
    x2 = jax.random.normal(k_x2, (4, 63, d2), dtype=jnp.float32)
    g2 = 1.0 + 0.05 * jax.random.normal(k_g, (d2,), dtype=jnp.float32)
    b2 = 0.05 * jax.random.normal(k_b, (d2,), dtype=jnp.float32)
    out2 = jax.block_until_ready(layer_normalize(x2, g2, b2))
    ref2 = _reference(x2, g2, b2)
    assert out2.shape == x2.shape
    assert float(jnp.max(jnp.abs(out2 - ref2))) < 1e-4, "rowwise path mismatch"

    print("KERNEL_OK")
</pallas_src>

<mosaic_0001>
module attributes {stable_mosaic.version = 11 : i64} {
  func.func @kernel(%arg0: i32, %arg1: memref<8x128xf32, #tpu.memory_space<vmem>>, %arg2: memref<1x128xf32, #tpu.memory_space<vmem>>, %arg3: memref<1x128xf32, #tpu.memory_space<vmem>>, %arg4: memref<128x128xbf16, #tpu.memory_space<vmem>>, %arg5: memref<8x128xf32, #tpu.memory_space<vmem>>) attributes {dimension_semantics = [#tpu.dimension_semantics<parallel>], iteration_bounds = array<i64: 1>, scalar_prefetch = 0 : i64, scratch_operands = 0 : i64, tpu.core_type = #tpu.core_type<tc>, window_params = [{transform_indices = @transform_0, window_bounds = array<i64: 8, 128>}, {pipeline_mode = #tpu.pipeline_mode<synchronous>, transform_indices = @transform_1, window_bounds = array<i64: 1, 128>}, {pipeline_mode = #tpu.pipeline_mode<synchronous>, transform_indices = @transform_2, window_bounds = array<i64: 1, 128>}, {pipeline_mode = #tpu.pipeline_mode<synchronous>, transform_indices = @transform_3, window_bounds = array<i64: 128, 128>}, {transform_indices = @transform_4, window_bounds = array<i64: 8, 128>}]} {
    %c0 = arith.constant 0 : index
    %c0_0 = arith.constant 0 : index
    %0 = vector.load %arg1[%c0, %c0_0] : memref<8x128xf32, #tpu.memory_space<vmem>>, vector<8x128xf32>
    %c0_1 = arith.constant 0 : index
    %c0_2 = arith.constant 0 : index
    %1 = vector.load %arg4[%c0_1, %c0_2] : memref<128x128xbf16, #tpu.memory_space<vmem>>, vector<128x128xbf16>
    %2 = arith.truncf %0 : vector<8x128xf32> to vector<8x128xbf16>
    %3 = arith.extf %2 : vector<8x128xbf16> to vector<8x128xf32>
    %4 = arith.subf %0, %3 : vector<8x128xf32>
    %5 = arith.truncf %4 : vector<8x128xf32> to vector<8x128xbf16>
    %cst = arith.constant dense<0.000000e+00> : vector<8x128xf32>
    %6 = tpu.matmul %2, %1, %cst {dimension_numbers = #tpu.dot_dimension_numbers<[1], [0], [0], [1], [0, 0, 1, 1], [], []>} : vector<8x128xbf16>, vector<128x128xbf16>, vector<8x128xf32> -> vector<8x128xf32>
    %cst_3 = arith.constant dense<0.000000e+00> : vector<8x128xf32>
    %7 = tpu.matmul %5, %1, %cst_3 {dimension_numbers = #tpu.dot_dimension_numbers<[1], [0], [0], [1], [0, 0, 1, 1], [], []>} : vector<8x128xbf16>, vector<128x128xbf16>, vector<8x128xf32> -> vector<8x128xf32>
    %8 = arith.addf %6, %7 : vector<8x128xf32>
    %9 = arith.subf %0, %8 : vector<8x128xf32>
    %10 = arith.mulf %9, %9 : vector<8x128xf32>
    %11 = arith.truncf %10 : vector<8x128xf32> to vector<8x128xbf16>
    %12 = arith.extf %11 : vector<8x128xbf16> to vector<8x128xf32>
    %13 = arith.subf %10, %12 : vector<8x128xf32>
    %14 = arith.truncf %13 : vector<8x128xf32> to vector<8x128xbf16>
    %cst_4 = arith.constant dense<0.000000e+00> : vector<8x128xf32>
    %15 = tpu.matmul %11, %1, %cst_4 {dimension_numbers = #tpu.dot_dimension_numbers<[1], [0], [0], [1], [0, 0, 1, 1], [], []>} : vector<8x128xbf16>, vector<128x128xbf16>, vector<8x128xf32> -> vector<8x128xf32>
    %cst_5 = arith.constant dense<0.000000e+00> : vector<8x128xf32>
    %16 = tpu.matmul %14, %1, %cst_5 {dimension_numbers = #tpu.dot_dimension_numbers<[1], [0], [0], [1], [0, 0, 1, 1], [], []>} : vector<8x128xbf16>, vector<128x128xbf16>, vector<8x128xf32> -> vector<8x128xf32>
    %17 = arith.addf %15, %16 : vector<8x128xf32>
    %cst_6 = arith.constant 9.99999974E-6 : f32
    %18 = vector.broadcast %cst_6 : f32 to vector<8x128xf32>
    %19 = arith.addf %17, %18 : vector<8x128xf32>
    %20 = math.rsqrt %19 : vector<8x128xf32>
    %21 = arith.mulf %9, %20 : vector<8x128xf32>
    %c0_7 = arith.constant 0 : index
    %c0_8 = arith.constant 0 : index
    %22 = vector.load %arg2[%c0_7, %c0_8] : memref<1x128xf32, #tpu.memory_space<vmem>>, vector<1x128xf32>
    %23 = vector.broadcast %22 : vector<1x128xf32> to vector<8x128xf32>
    %24 = arith.mulf %21, %23 : vector<8x128xf32>
    %c0_9 = arith.constant 0 : index
    %c0_10 = arith.constant 0 : index
    %25 = vector.load %arg3[%c0_9, %c0_10] : memref<1x128xf32, #tpu.memory_space<vmem>>, vector<1x128xf32>
    %26 = vector.broadcast %25 : vector<1x128xf32> to vector<8x128xf32>
    %27 = arith.addf %24, %26 : vector<8x128xf32>
    %c0_11 = arith.constant 0 : index
    %c0_12 = arith.constant 0 : index
    %28 = vector.load %arg5[%c0_11, %c0_12] : memref<8x128xf32, #tpu.memory_space<vmem>>, vector<8x128xf32>
    tpu.vector_store %arg5[%c0_11, %c0_12], %27 {strides = array<i32>} : memref<8x128xf32, #tpu.memory_space<vmem>>, vector<8x128xf32>,
    return
  }
  func.func @transform_0(%arg0: i32) -> (i32, i32) {
    %c0_i32 = arith.constant 0 : i32
    %c0_i32_0 = arith.constant 0 : i32
    return %arg0, %c0_i32 : i32, i32
  }
  func.func @transform_1(%arg0: i32) -> (i32, i32) {
    %c0_i32 = arith.constant 0 : i32
    %c0_i32_0 = arith.constant 0 : i32
    %c0_i32_1 = arith.constant 0 : i32
    return %c0_i32, %c0_i32_0 : i32, i32
  }
  func.func @transform_2(%arg0: i32) -> (i32, i32) {
    %c0_i32 = arith.constant 0 : i32
    %c0_i32_0 = arith.constant 0 : i32
    %c0_i32_1 = arith.constant 0 : i32
    return %c0_i32, %c0_i32_0 : i32, i32
  }
  func.func @transform_3(%arg0: i32) -> (i32, i32) {
    %c0_i32 = arith.constant 0 : i32
    %c0_i32_0 = arith.constant 0 : i32
    %c0_i32_1 = arith.constant 0 : i32
    return %c0_i32, %c0_i32_0 : i32, i32
  }
  func.func @transform_4(%arg0: i32) -> (i32, i32) {
    %c0_i32 = arith.constant 0 : i32
    %c0_i32_0 = arith.constant 0 : i32
    return %arg0, %c0_i32 : i32, i32
  }
}

</mosaic_0001>

<llo_original>
// kernel: tpu_custom_call.1
$region0: #{tpu_custom_call.1}
  #allocation0 [shape = 'u32[]', space=smem, size = 0x4, offset = 0x4, fixed_abs, tag = 'smem constant byte address 0x4 - core index']
  #allocation1 [shape = 'u32[144,128]{1,0:T(1,128)}', space=vmem, size = 0x12000, scoped, tag = 'internal scratch']
  %s0 = inlined_call_operand.hbm [shape: f32[4,128], index: 0, kind: input, shape index: {}]
  %s1 = inlined_call_operand.vmem [shape: f32[1,128], index: 1, kind: input, shape index: {}]
  %s2 = inlined_call_operand.vmem [shape: f32[1,128], index: 2, kind: input, shape index: {}]
  %s3 = inlined_call_operand.hbm [shape: bf16[128,128], index: 3, kind: input, shape index: {}]
  %s4 = inlined_call_operand.hbm [shape: f32[4,128], index: 4, kind: output, shape index: {}]
  %s5 = sld [smem:[#allocation0]]
  $region34: #{tpu_custom_call.1} parent=0
    _
  %s7 = ssub.s32 1, %s5
  %s8 = scalar_select 0, %s7, %s5
  $region1: #{tpu_custom_call.1} parent=0
    #allocation2 [shape = 'u8[4096]{0}', space=vmem, size = 0x1000, scoped, tag = 'input window, operand 0, single buffered']
    #allocation3 [shape = 's32[1]{0}', space=sflag, size = 0x4, scoped, tag = 'scoped memory for tpu_custom_call.1']
    #allocation4 [shape = 's32[1]{0}', space=sflag, size = 0x4, scoped, tag = 'scoped memory for tpu_custom_call.1']
    #allocation5 [shape = 'u8[32768]{0}', space=vmem, size = 0x8000, scoped, tag = 'input window, operand 3, single buffered']
    #allocation6 [shape = 's32[1]{0}', space=sflag, size = 0x4, scoped, tag = 'scoped memory for tpu_custom_call.1']
    #allocation7 [shape = 'u8[4096]{0}', space=vmem, size = 0x1000, scoped, tag = 'output window, operand 0, single buffered']
    %9 = vsyncpa [#allocation3], 0
    %10 = vsyncpa [#allocation6], 0
    %11 = vsyncpa [#allocation4], 0
    // Predicated region
    $region2: #{tpu_custom_call.1} parent=1 // pred_check
      _
    $region3: #{tpu_custom_call.1} parent=1 // pred_check_branch
      %13 = sbr.rel (0) target = $region5
    $region4: #{tpu_custom_call.1} parent=1 // pred_region
      %s15 = ssub.s32 128, 64
      %16 = vsyncadd [#allocation3], %s15
      %s17 = sshll.u32 [#allocation2], 4
      %s18 = int_to_ptr.vmem [resolvable:$true] %s17
      %23 = dma.hbm_to_vmem [thread:$0]  %s0, 64, %s18, [#allocation3], 64, 64, 4
    $region5: #{tpu_custom_call.1} parent=1 // pred_fallthru
      _
    // Predicated region
    $region6: #{tpu_custom_call.1} parent=1 // pred_check
      _
    $region7: #{tpu_custom_call.1} parent=1 // pred_check_branch
      %25 = sbr.rel (0) target = $region9
    $region8: #{tpu_custom_call.1} parent=1 // pred_region
      _
    $region9: #{tpu_custom_call.1} parent=1 // pred_fallthru
      _
    // Predicated region
    $region10: #{tpu_custom_call.1} parent=1 // pred_check
      _
    $region11: #{tpu_custom_call.1} parent=1 // pred_check_branch
      %27 = sbr.rel (0) target = $region13
    $region12: #{tpu_custom_call.1} parent=1 // pred_region
      _
    $region13: #{tpu_custom_call.1} parent=1 // pred_fallthru
      _
    // Predicated region
    $region14: #{tpu_custom_call.1} parent=1 // pred_check
      _
    $region15: #{tpu_custom_call.1} parent=1 // pred_check_branch
      %29 = sbr.rel (0) target = $region17
    $region16: #{tpu_custom_call.1} parent=1 // pred_region
      %s31 = ssub.s32 1024, 1024
      %32 = vsyncadd [#allocation6], %s31
      %s33 = sshll.u32 [#allocation5], 4
      %s34 = int_to_ptr.vmem [resolvable:$true] %s33
      %39 = dma.hbm_to_vmem [thread:$0]  %s3, 1024, %s34, [#allocation6], 64, 64, 4
    $region17: #{tpu_custom_call.1} parent=1 // pred_fallthru
      _
    // Predicated region
    $region18: #{tpu_custom_call.1} parent=1 // pred_check
      _
    $region19: #{tpu_custom_call.1} parent=1 // pred_check_branch
      %41 = sbr.rel (0) target = $region21
    $region20: #{tpu_custom_call.1} parent=1 // pred_region
      %42 = dma.done [#allocation3], 128
    $region21: #{tpu_custom_call.1} parent=1 // pred_fallthru
      _
    // Predicated region
    $region22: #{tpu_custom_call.1} parent=1 // pred_check
      _
    $region23: #{tpu_custom_call.1} parent=1 // pred_check_branch
      %44 = sbr.rel (0) target = $region25
    $region24: #{tpu_custom_call.1} parent=1 // pred_region
      %45 = dma.done [#allocation6], 1024
    $region25: #{tpu_custom_call.1} parent=1 // pred_fallthru
      _
    %v47 = vld [vmem:[#allocation2] sm:$0xff]
    %v48 = vld [vmem:[#allocation5] sm:$0xf]
    %v49 = vld [vmem:[#allocation5 + $0x4] sm:$0xf]
    %v50 = vld [vmem:[#allocation5 + $0x8] sm:$0xf]
    %v51 = vld [vmem:[#allocation5 + $0xc] sm:$0xf]
    %v52 = vld [vmem:[#allocation5 + $0x10] sm:$0xf]
    %v53 = vld [vmem:[#allocation5 + $0x14] sm:$0xf]
    %v54 = vld [vmem:[#allocation5 + $0x18] sm:$0xf]
    %v55 = vld [vmem:[#allocation5 + $0x1c] sm:$0xf]
    %v56 = vld [vmem:[#allocation5 + $0x20] sm:$0xf]
    %v57 = vld [vmem:[#allocation5 + $0x24] sm:$0xf]
    %v58 = vld [vmem:[#allocation5 + $0x28] sm:$0xf]
    %v59 = vld [vmem:[#allocation5 + $0x2c] sm:$0xf]
    %v60 = vld [vmem:[#allocation5 + $0x30] sm:$0xf]
    %v61 = vld [vmem:[#allocation5 + $0x34] sm:$0xf]
    %v62 = vld [vmem:[#allocation5 + $0x38] sm:$0xf]
    %v63 = vld [vmem:[#allocation5 + $0x3c] sm:$0xf]
    %v64 = vpack.c.bf16 %v47, %v47
    %v65 = vunpack.c.l.bf16 %v64
    %v66 = vsub.f32 %v47, %v65
    %v67 = vpack.c.bf16 %v66, %v66
    %v84 = vunpack.c.l.b16 %v48
    %v85 = vunpack.c.l.b16 %v49
    %v86 = vunpack.c.l.b16 %v50
    %v87 = vunpack.c.l.b16 %v51
    %v88 = vunpack.c.l.b16 %v52
    %v89 = vunpack.c.l.b16 %v53
    %v90 = vunpack.c.l.b16 %v54
    %v91 = vunpack.c.l.b16 %v55
    %v92 = vunpack.c.l.b16 %v56
    %v93 = vunpack.c.l.b16 %v57
    %v94 = vunpack.c.l.b16 %v58
    %v95 = vunpack.c.l.b16 %v59
    %v96 = vunpack.c.l.b16 %v60
    %v97 = vunpack.c.l.b16 %v61
    %v98 = vunpack.c.l.b16 %v62
    %v99 = vunpack.c.l.b16 %v63
    %v100 = vpack.c.b16 %v85, %v84
    %v101 = vpack.c.b16 %v87, %v86
    %v102 = vpack.c.b16 %v89, %v88
    %v103 = vpack.c.b16 %v91, %v90
    %v104 = vpack.c.b16 %v93, %v92
    %v105 = vpack.c.b16 %v95, %v94
    %v106 = vpack.c.b16 %v97, %v96
    %v107 = vpack.c.b16 %v99, %v98
    %116 = vmatprep.subr.bf16.mxu0 0
    %117 = vmatpush1.bf16.msra.mxu0 %v107
    %118 = vmatprep.subr.bf16.mxu0 0
    %119 = vmatpush1.bf16.msra.mxu0 %v106
    %120 = vmatprep.subr.bf16.mxu0 0
    %121 = vmatpush1.bf16.msra.mxu0 %v105
    %122 = vmatprep.subr.bf16.mxu0 0
    %123 = vmatpush1.bf16.msra.mxu0 %v104
    %124 = vmatprep.subr.bf16.mxu0 0
    %125 = vmatpush1.bf16.msra.mxu0 %v103
    %126 = vmatprep.subr.bf16.mxu0 0
    %127 = vmatpush1.bf16.msra.mxu0 %v102
    %128 = vmatprep.subr.bf16.mxu0 0
    %129 = vmatpush1.bf16.msra.mxu0 %v101
    %130 = vmatprep.subr.bf16.mxu0 0
    %131 = vmatpush1.bf16.msra.mxu0 %v100
    %132 = vmatprep.subr.bf16.mxu0 0
    %133 = vmatpush2.bf16.msra.mxu0 0
    %134 = vmatprep.subr.bf16.mxu0 0
    %135 = vmatpush2.bf16.msra.mxu0 0
    %136 = vmatprep.subr.bf16.mxu0 0
    %137 = vmatpush2.bf16.msra.mxu0 0
    %138 = vmatprep.subr.bf16.mxu0 0
    %139 = vmatpush2.bf16.msra.mxu0 0
    %140 = vmatprep.subr.bf16.mxu0 0
    %141 = vmatpush2.bf16.msra.mxu0 0
    %142 = vmatprep.subr.bf16.mxu0 0
    %143 = vmatpush2.bf16.msra.mxu0 0
    %144 = vmatprep.subr.bf16.mxu0 0
    %145 = vmatpush2.bf16.msra.mxu0 0
    %146 = vmatprep.subr.bf16.mxu0 0
    %147 = vmatpush2.bf16.msra.mxu0 0
    %148 = vmatprep.mubr.bf16.mxu0 0
    %149 = vmatmul.mubr.bf16.gmra.mxu0 %v67
    %v150 = vpop.f32.mrf.mxu0
    %v151 = vadd.f32 0.0, %v150
    %v152 = vpop.f32.mrf.mxu0
    %v153 = vpop.f32.mrf.mxu0
    %v154 = vpop.f32.mrf.mxu0
    %155 = vdwg.mxu0
    %156 = vmatprep.subr.bf16.mxu0 0
    %157 = vmatpush1.bf16.msra.mxu0 %v107
    %158 = vmatprep.subr.bf16.mxu0 0
    %159 = vmatpush1.bf16.msra.mxu0 %v106
    %160 = vmatprep.subr.bf16.mxu0 0
    %161 = vmatpush1.bf16.msra.mxu0 %v105
    %162 = vmatprep.subr.bf16.mxu0 0
    %163 = vmatpush1.bf16.msra.mxu0 %v104
    %164 = vmatprep.subr.bf16.mxu0 0
    %165 = vmatpush1.bf16.msra.mxu0 %v103
    %166 = vmatprep.subr.bf16.mxu0 0
    %167 = vmatpush1.bf16.msra.mxu0 %v102
    %168 = vmatprep.subr.bf16.mxu0 0
    %169 = vmatpush1.bf16.msra.mxu0 %v101
    %170 = vmatprep.subr.bf16.mxu0 0
    %171 = vmatpush1.bf16.msra.mxu0 %v100
    %172 = vmatprep.subr.bf16.mxu0 0
    %173 = vmatpush2.bf16.msra.mxu0 0
    %174 = vmatprep.subr.bf16.mxu0 0
    %175 = vmatpush2.bf16.msra.mxu0 0
    %176 = vmatprep.subr.bf16.mxu0 0
    %177 = vmatpush2.bf16.msra.mxu0 0
    %178 = vmatprep.subr.bf16.mxu0 0
    %179 = vmatpush2.bf16.msra.mxu0 0
    %180 = vmatprep.subr.bf16.mxu0 0
    %181 = vmatpush2.bf16.msra.mxu0 0
    %182 = vmatprep.subr.bf16.mxu0 0
    %183 = vmatpush2.bf16.msra.mxu0 0
    %184 = vmatprep.subr.bf16.mxu0 0
    %185 = vmatpush2.bf16.msra.mxu0 0
    %186 = vmatprep.subr.bf16.mxu0 0
    %187 = vmatpush2.bf16.msra.mxu0 0
    %188 = vmatprep.mubr.bf16.mxu0 0
    %189 = vmatmul.mubr.bf16.gmra.mxu0 %v64
    %v190 = vpop.f32.mrf.mxu0
    %v191 = vadd.f32 %v151, %v190
    %v192 = vpop.f32.mrf.mxu0
    %v193 = vpop.f32.mrf.mxu0
    %v194 = vpop.f32.mrf.mxu0
    %195 = vdwg.mxu0
    %v196 = vsub.f32 %v47, %v191
    %v197 = vmul.f32 %v196, %v196
    %v198 = vpack.c.bf16 %v197, %v197
    %v199 = vunpack.c.l.bf16 %v198
    %v200 = vsub.f32 %v197, %v199
    %v201 = vpack.c.bf16 %v200, %v200
    %202 = vmatprep.subr.bf16.mxu0 0
    %203 = vmatpush1.bf16.msra.mxu0 %v107
    %204 = vmatprep.subr.bf16.mxu0 0
    %205 = vmatpush1.bf16.msra.mxu0 %v106
    %206 = vmatprep.subr.bf16.mxu0 0
    %207 = vmatpush1.bf16.msra.mxu0 %v105
    %208 = vmatprep.subr.bf16.mxu0 0
    %209 = vmatpush1.bf16.msra.mxu0 %v104
    %210 = vmatprep.subr.bf16.mxu0 0
    %211 = vmatpush1.bf16.msra.mxu0 %v103
    %212 = vmatprep.subr.bf16.mxu0 0
    %213 = vmatpush1.bf16.msra.mxu0 %v102
    %214 = vmatprep.subr.bf16.mxu0 0
    %215 = vmatpush1.bf16.msra.mxu0 %v101
    %216 = vmatprep.subr.bf16.mxu0 0
    %217 = vmatpush1.bf16.msra.mxu0 %v100
    %218 = vmatprep.subr.bf16.mxu0 0
    %219 = vmatpush2.bf16.msra.mxu0 0
    %220 = vmatprep.subr.bf16.mxu0 0
    %221 = vmatpush2.bf16.msra.mxu0 0
    %222 = vmatprep.subr.bf16.mxu0 0
    %223 = vmatpush2.bf16.msra.mxu0 0
    %224 = vmatprep.subr.bf16.mxu0 0
    %225 = vmatpush2.bf16.msra.mxu0 0
    %226 = vmatprep.subr.bf16.mxu0 0
    %227 = vmatpush2.bf16.msra.mxu0 0
    %228 = vmatprep.subr.bf16.mxu0 0
    %229 = vmatpush2.bf16.msra.mxu0 0
    %230 = vmatprep.subr.bf16.mxu0 0
    %231 = vmatpush2.bf16.msra.mxu0 0
    %232 = vmatprep.subr.bf16.mxu0 0
    %233 = vmatpush2.bf16.msra.mxu0 0
    %234 = vmatprep.mubr.bf16.mxu0 0
    %235 = vmatmul.mubr.bf16.gmra.mxu0 %v201
    %v236 = vpop.f32.mrf.mxu0
    %v237 = vadd.f32 0.0, %v236
    %v238 = vpop.f32.mrf.mxu0
    %v239 = vpop.f32.mrf.mxu0
    %v240 = vpop.f32.mrf.mxu0
    %241 = vdwg.mxu0
    %242 = vmatprep.subr.bf16.mxu0 0
    %243 = vmatpush1.bf16.msra.mxu0 %v107
    %244 = vmatprep.subr.bf16.mxu0 0
    %245 = vmatpush1.bf16.msra.mxu0 %v106
    %246 = vmatprep.subr.bf16.mxu0 0
    %247 = vmatpush1.bf16.msra.mxu0 %v105
    %248 = vmatprep.subr.bf16.mxu0 0
    %249 = vmatpush1.bf16.msra.mxu0 %v104
    %250 = vmatprep.subr.bf16.mxu0 0
    %251 = vmatpush1.bf16.msra.mxu0 %v103
    %252 = vmatprep.subr.bf16.mxu0 0
    %253 = vmatpush1.bf16.msra.mxu0 %v102
    %254 = vmatprep.subr.bf16.mxu0 0
    %255 = vmatpush1.bf16.msra.mxu0 %v101
    %256 = vmatprep.subr.bf16.mxu0 0
    %257 = vmatpush1.bf16.msra.mxu0 %v100
    %258 = vmatprep.subr.bf16.mxu0 0
    %259 = vmatpush2.bf16.msra.mxu0 0
    %260 = vmatprep.subr.bf16.mxu0 0
    %261 = vmatpush2.bf16.msra.mxu0 0
    %262 = vmatprep.subr.bf16.mxu0 0
    %263 = vmatpush2.bf16.msra.mxu0 0
    %264 = vmatprep.subr.bf16.mxu0 0
    %265 = vmatpush2.bf16.msra.mxu0 0
    %266 = vmatprep.subr.bf16.mxu0 0
    %267 = vmatpush2.bf16.msra.mxu0 0
    %268 = vmatprep.subr.bf16.mxu0 0
    %269 = vmatpush2.bf16.msra.mxu0 0
    %270 = vmatprep.subr.bf16.mxu0 0
    %271 = vmatpush2.bf16.msra.mxu0 0
    %272 = vmatprep.subr.bf16.mxu0 0
    %273 = vmatpush2.bf16.msra.mxu0 0
    %274 = vmatprep.mubr.bf16.mxu0 0
    %275 = vmatmul.mubr.bf16.gmra.mxu0 %v198
    %v276 = vpop.f32.mrf.mxu0
    %v277 = vadd.f32 %v237, %v276
    %v278 = vpop.f32.mrf.mxu0
    %v279 = vpop.f32.mrf.mxu0
    %v280 = vpop.f32.mrf.mxu0
    %281 = vdwg.mxu0
    %v282 = vadd.f32 %v277, 1e-05
    %v283 = vrsqrt.pop %v282
    %v284 = vmul.f32 %v196, %v283
    %v285 = vld [vmem:[%s1] sm:$0x1]
    %v287 = vlaneseq
    %v288 = vshrl.u32 %v287, 7
    %v289 = vsub.s32 0, %v288
    %v290 = vrot.slane %v285, %v289
    %v292 = vmul.f32 %v284, %v290
    %v293 = vld [vmem:[%s2] sm:$0x1]
    %v295 = vlaneseq
    %v296 = vshrl.u32 %v295, 7
    %v297 = vsub.s32 0, %v296
    %v298 = vrot.slane %v293, %v297
    %v300 = vadd.f32 %v292, %v298
    %301 = vst [vmem:[#allocation7] sm:$0xff] %v300
    // Predicated region
    $region26: #{tpu_custom_call.1} parent=1 // pred_check
      _
    $region27: #{tpu_custom_call.1} parent=1 // pred_check_branch
      %303 = sbr.rel (0) target = $region29
    $region28: #{tpu_custom_call.1} parent=1 // pred_region
      %s305 = ssub.s32 128, 64
      %306 = vsyncadd [#allocation4], %s305
      %s307 = sshll.u32 [#allocation7], 4
      %s308 = int_to_ptr.vmem [resolvable:$true] %s307
      %313 = dma.vmem_to_hbm [thread:$0]  %s308, 64, %s4, [#allocation4], 64, 64, 4
    $region29: #{tpu_custom_call.1} parent=1 // pred_fallthru
      _
    // Predicated region
    $region30: #{tpu_custom_call.1} parent=1 // pred_check
      _
    $region31: #{tpu_custom_call.1} parent=1 // pred_check_branch
      %315 = sbr.rel (0) target = $region33
    $region32: #{tpu_custom_call.1} parent=1 // pred_region
      %316 = dma.done [#allocation4], 128
    $region33: #{tpu_custom_call.1} parent=1 // pred_fallthru
      _
    %317 = vsyncpa [#allocation3], 1
    %318 = vsyncpa [#allocation6], 1
    %319 = vsyncpa [#allocation4], 1

</llo_original>
